<compile_context>
chip_gen: v7x
topology: tpu7x:2x2x1
jax: 0.10.0
libtpu: 0.0.40
codegen_flags: <defaults>
</compile_context>

<pallas_src>
import jax
import jax.numpy as jnp
from jax.experimental import pallas as pl
from jax.experimental.pallas import tpu as pltpu


_LANE = 128
_MAX_LANE_BLOCK = 4096  # lanes per time-block cap


def _cdiv(a, b):
    return -(-a // b)


def _snake_beta_kernel(p_ref, x_ref, o_ref):
    # p_ref        : (R_blk, 2) f32; col 0 = exp(alpha), col 1 = 1/(exp(beta)+1e-9)
    # x_ref, o_ref : (R_blk, T_blk) tile; rows = flattened batch*channel, lanes = time
    x = x_ref[...].astype(jnp.float32)       # f32 math even for bf16 I/O
    p = p_ref[...]
    scale = p[:, 0:1]                        # (R_blk, 1), broadcast along lanes
    inv_beta = p[:, 1:2]
    s = jnp.sin(x * scale)
    o_ref[...] = (x + inv_beta * (s * s)).astype(o_ref.dtype)


def _default_max_block_bytes():
    """~8 MiB blocks on 128-MiB-VMEM chips (v5e/v6e), ~4 MiB on v7x (64 MiB/TC)."""
    try:
        vmem = getattr(pltpu.get_tpu_info(), "vmem_capacity_bytes", None)
    except Exception:
        vmem = None
    if vmem is not None and vmem >= 100 * 1024 * 1024:
        return 8 * 1024 * 1024
    return 4 * 1024 * 1024


def _pick_tiles(R, T, itemsize, max_block_bytes):
    """Pick a lane-dense (R_blk, T_blk) tile.

    Each of the last two block dims is either a multiple of the native tile size
    (sublane alignment, 128 lanes) or spans the full axis; ragged trailing blocks
    are handled by Pallas masking, so odd T / odd R never inflate the block.
    """
    # Lane (time) axis: balanced multiples of 128, each block <= _MAX_LANE_BLOCK lanes.
    n128 = _cdiv(T, _LANE)
    n_t = _cdiv(n128, _MAX_LANE_BLOCK // _LANE)
    t_blk = _LANE * _cdiv(n128, n_t)
    if t_blk >= T:
        t_blk = T  # full axis

    # Sublane (row) axis: dtype-aware alignment (8 rows f32, 16 bf16, 32 int8/fp8).
    align = max(8, 32 // max(1, itemsize))
    rows_budget = max(align, max_block_bytes // max(1, t_blk * itemsize))
    r_blk = max(align, (rows_budget // align) * align)
    if r_blk >= R:
        r_blk = R  # full axis

    # Megacore (v7x): prefer >= 2 blocks along a "parallel" axis; neutral on v5e/v6e.
    if _cdiv(R, r_blk) == 1 and _cdiv(T, t_blk) == 1 and _cdiv(T, _LANE) >= 2:
        t_blk = _LANE * _cdiv(_cdiv(T, _LANE), 2)

    return r_blk, t_blk


def snake_beta_pallas(x, alpha, beta, *, max_block_bytes=None):
    """SnakeBeta forward (alpha_logscale semantics of the reference module):

        out = x + 1/(exp(beta)+1e-9) * sin(x * exp(alpha))**2

    x:            (B, C, T) float32 or bfloat16 (channels-first 1D).  bf16 I/O is the
                  recommended path on v5e/v6e (HBM-bound); compute stays f32 internally.
    alpha, beta:  (C,) log-scale parameters.
    """
    B, C, T = x.shape
    R = B * C
    if max_block_bytes is None:
        max_block_bytes = _default_max_block_bytes()

    # Hoist parameter transcendentals out of the kernel (tiny per-channel XLA ops).
    scale = jnp.exp(alpha.astype(jnp.float32))
    inv_beta = 1.0 / (jnp.exp(beta.astype(jnp.float32)) + 1e-9)

    # Flatten to lane-dense 2-D: rows = batch*channel (row r -> channel r % C), lanes = time.
    x2 = x.reshape(R, T)
    # Pack both per-row params into one (R, 2) f32 input -> single small DMA per row block.
    params = jnp.stack([jnp.tile(scale, B), jnp.tile(inv_beta, B)], axis=-1)

    r_blk, t_blk = _pick_tiles(R, T, x.dtype.itemsize, max_block_bytes)
    grid = (_cdiv(R, r_blk), _cdiv(T, t_blk))

    # VMEM need: double-buffered in+out blocks + double-buffered param tile + slack.
    block_bytes = r_blk * t_blk * x.dtype.itemsize
    vmem_limit = 2 * 2 * block_bytes + 2 * (r_blk * 2 * 4) + (8 << 20)

    cost = pl.CostEstimate(
        flops=4 * R * T,
        transcendentals=R * T,
        bytes_accessed=2 * R * T * x.dtype.itemsize + params.size * 4,
    )

    out2 = pl.pallas_call(
        _snake_beta_kernel,
        out_shape=jax.ShapeDtypeStruct((R, T), x.dtype),
        grid_spec=pltpu.PrefetchScalarGridSpec(
            num_scalar_prefetch=0,
            grid=grid,
            in_specs=[
                pl.BlockSpec((r_blk, 2), lambda r, t: (r, 0)),       # packed [exp(alpha), 1/(exp(beta)+eps)]
                pl.BlockSpec((r_blk, t_blk), lambda r, t: (r, t)),   # x tile
            ],
            out_specs=pl.BlockSpec((r_blk, t_blk), lambda r, t: (r, t)),
        ),
        compiler_params=pltpu.CompilerParams(
            dimension_semantics=("parallel", "parallel"),
            vmem_limit_bytes=int(vmem_limit),
        ),
        cost_estimate=cost,
    )(params, x2)

    return out2.reshape(B, C, T)


def snake_beta_reference(x, alpha, beta):
    a = jnp.exp(alpha.astype(jnp.float32))[None, :, None]
    b = jnp.exp(beta.astype(jnp.float32))[None, :, None]
    xf = x.astype(jnp.float32)
    return (xf + (1.0 / (b + 1e-9)) * jnp.sin(xf * a) ** 2).astype(x.dtype)


if __name__ == "__main__":
    key = jax.random.PRNGKey(0)
    k1, k2, k3, k4, k5 = jax.random.split(key, 5)

    # Case 1: module-default init (zeros -> exp = 1), small NCL shape.
    B, C, T = 2, 8, 128
    x = jax.random.normal(k1, (B, C, T), dtype=jnp.float32)
    alpha = jnp.zeros((C,), dtype=jnp.float32)
    beta = jnp.zeros((C,), dtype=jnp.float32)
    out = jax.block_until_ready(snake_beta_pallas(x, alpha, beta))
    ref = snake_beta_reference(x, alpha, beta)
    assert out.shape == (B, C, T)
    assert jnp.allclose(out, ref, atol=1e-5, rtol=1e-5), "f32 small-shape mismatch"

    # Case 2: nonzero params, T large enough to exercise the lane-tiled grid (2 t-blocks).
    B2, C2, T2 = 1, 8, 8192
    x2 = jax.random.normal(k2, (B2, C2, T2), dtype=jnp.float32)
    alpha2 = 0.1 * jax.random.normal(k3, (C2,), dtype=jnp.float32)
    beta2 = 0.1 * jax.random.normal(k4, (C2,), dtype=jnp.float32)
    out2 = jax.block_until_ready(snake_beta_pallas(x2, alpha2, beta2))
    ref2 = snake_beta_reference(x2, alpha2, beta2)
    assert jnp.allclose(out2, ref2, atol=1e-5, rtol=1e-5), "tiled f32 mismatch"

    # Case 3: ragged shape (R not multiple of 8, T not multiple of 128) -> masked blocks.
    B3, C3, T3 = 1, 5, 300
    x3 = jax.random.normal(k5, (B3, C3, T3), dtype=jnp.float32)
    alpha3 = 0.1 * jax.random.normal(k3, (C3,), dtype=jnp.float32)
    beta3 = 0.1 * jax.random.normal(k4, (C3,), dtype=jnp.float32)
    out3 = jax.block_until_ready(snake_beta_pallas(x3, alpha3, beta3))
    ref3 = snake_beta_reference(x3, alpha3, beta3)
    assert jnp.allclose(out3, ref3, atol=1e-5, rtol=1e-5), "ragged f32 mismatch"

    # Case 4: bf16 I/O (recommended on v5e/v6e; compute stays f32 inside the kernel).
    xb = x.astype(jnp.bfloat16)
    outb = jax.block_until_ready(snake_beta_pallas(xb, alpha2, beta2))
    refb = snake_beta_reference(xb, alpha2, beta2)
    assert jnp.allclose(outb.astype(jnp.float32), refb.astype(jnp.float32),
                        atol=2e-2, rtol=2e-2), "bf16 mismatch"

    print("KERNEL_OK")
</pallas_src>

<mosaic_0001>
module attributes {stable_mosaic.version = 11 : i64} {
  func.func @_snake_beta_kernel(%arg0: i32, %arg1: i32, %arg2: memref<16x2xf32, #tpu.memory_space<vmem>>, %arg3: memref<16x128xf32, #tpu.memory_space<vmem>>, %arg4: memref<16x128xf32, #tpu.memory_space<vmem>>) attributes {dimension_semantics = [#tpu.dimension_semantics<parallel>, #tpu.dimension_semantics<parallel>], iteration_bounds = array<i64: 1, 1>, scalar_prefetch = 0 : i64, scratch_operands = 0 : i64, tpu.core_type = #tpu.core_type<tc>, window_params = [{transform_indices = @transform_0, window_bounds = array<i64: 16, 2>}, {transform_indices = @transform_1, window_bounds = array<i64: 16, 128>}, {transform_indices = @transform_2, window_bounds = array<i64: 16, 128>}]} {
    %c0 = arith.constant 0 : index
    %c0_0 = arith.constant 0 : index
    %0 = vector.load %arg3[%c0, %c0_0] : memref<16x128xf32, #tpu.memory_space<vmem>>, vector<16x128xf32>
    %c0_1 = arith.constant 0 : index
    %c0_2 = arith.constant 0 : index
    %1 = vector.load %arg2[%c0_1, %c0_2] : memref<16x2xf32, #tpu.memory_space<vmem>>, vector<16x2xf32>
    %2 = vector.extract_strided_slice %1 {offsets = [0, 0], sizes = [16, 1], strides = [1, 1]} : vector<16x2xf32> to vector<16x1xf32>
    %3 = vector.extract_strided_slice %1 {offsets = [0, 1], sizes = [16, 1], strides = [1, 1]} : vector<16x2xf32> to vector<16x1xf32>
    %4 = vector.broadcast %2 : vector<16x1xf32> to vector<16x128xf32>
    %5 = arith.mulf %0, %4 : vector<16x128xf32>
    %6 = math.sin %5 : vector<16x128xf32>
    %7 = arith.mulf %6, %6 : vector<16x128xf32>
    %8 = vector.broadcast %3 : vector<16x1xf32> to vector<16x128xf32>
    %9 = arith.mulf %8, %7 : vector<16x128xf32>
    %10 = arith.addf %0, %9 : vector<16x128xf32>
    %c0_3 = arith.constant 0 : index
    %c0_4 = arith.constant 0 : index
    %11 = vector.load %arg4[%c0_3, %c0_4] : memref<16x128xf32, #tpu.memory_space<vmem>>, vector<16x128xf32>
    tpu.vector_store %arg4[%c0_3, %c0_4], %10 {strides = array<i32>} : memref<16x128xf32, #tpu.memory_space<vmem>>, vector<16x128xf32>,
    return
  }
  func.func @transform_0(%arg0: i32, %arg1: i32) -> (i32, i32) {
    %c0_i32 = arith.constant 0 : i32
    %c0_i32_0 = arith.constant 0 : i32
    return %arg0, %c0_i32 : i32, i32
  }
  func.func @transform_1(%arg0: i32, %arg1: i32) -> (i32, i32) {
    %c0_i32 = arith.constant 0 : i32
    return %arg0, %arg1 : i32, i32
  }
  func.func @transform_2(%arg0: i32, %arg1: i32) -> (i32, i32) {
    %c0_i32 = arith.constant 0 : i32
    return %arg0, %arg1 : i32, i32
  }
}

</mosaic_0001>

<llo_original>
// kernel: tpu_custom_call.1
$region0: #{tpu_custom_call.1}
  #allocation0 [shape = 'u32[]', space=smem, size = 0x4, offset = 0x4, fixed_abs, tag = 'smem constant byte address 0x4 - core index']
  #allocation1 [shape = 'u32[144,128]{1,0:T(1,128)}', space=vmem, size = 0x12000, scoped, tag = 'internal scratch']
  %s0 = inlined_call_operand.vmem [shape: f32[16,2], index: 0, kind: input, shape index: {}]
  %s1 = inlined_call_operand.vmem [shape: f32[16,128], index: 1, kind: input, shape index: {}]
  %s2 = inlined_call_operand.hbm [shape: f32[16,128], index: 2, kind: output, shape index: {}]
  %s3 = sld [smem:[#allocation0]]
  $region18: #{tpu_custom_call.1} parent=0
    _
  %s5 = ssub.s32 1, %s3
  %s6 = scalar_select 0, %s5, %s3
  $region1: #{tpu_custom_call.1} parent=0
    #allocation2 [shape = 'u8[8192]{0}', space=vmem, size = 0x2000, scoped, tag = 'output window, operand 0, single buffered']
    #allocation3 [shape = 's32[1]{0}', space=sflag, size = 0x4, scoped, tag = 'scoped memory for tpu_custom_call.1']
    %7 = vsyncpa [#allocation3], 0
    // Predicated region
    $region2: #{tpu_custom_call.1} parent=1 // pred_check
      _
    $region3: #{tpu_custom_call.1} parent=1 // pred_check_branch
      %9 = sbr.rel (0) target = $region5
    $region4: #{tpu_custom_call.1} parent=1 // pred_region
      _
    $region5: #{tpu_custom_call.1} parent=1 // pred_fallthru
      _
    // Predicated region
    $region6: #{tpu_custom_call.1} parent=1 // pred_check
      _
    $region7: #{tpu_custom_call.1} parent=1 // pred_check_branch
      %11 = sbr.rel (0) target = $region9
    $region8: #{tpu_custom_call.1} parent=1 // pred_region
      _
    $region9: #{tpu_custom_call.1} parent=1 // pred_fallthru
      _
    %v12 = vld [vmem:[%s1] sm:$0xff]
    %v13 = vld [vmem:[%s1 + $0x8] sm:$0xff]
    %v14 = vld [vmem:[%s0] sm:$0xff]
    %v15 = vld [vmem:[%s0 + $0x8] sm:$0xff]
    %17 = vset.pattern.permute.xlu0 0
    %18 = vperm.xlu0 %17, %v14
    %v19 = vpop.permute.xlu0 %18
    %22 = vset.pattern.permute.xlu0 0
    %23 = vperm.xlu0 %22, %v15
    %v24 = vpop.permute.xlu0 %23
    %v26 = vmul.f32 %v12, %v19
    %v27 = vmul.f32 %v13, %v24
    %v28 = vand.u32 2147483647, %v26
    %vm29 = vcmp.le.f32.partialorder %v28, 0.7853982
    %vm30 = vcmp.lt.s32.totalorder %v26, 0
    %v31 = vand.u32 %v26, 2139095040
    %v32 = vshrl.u32 %v31, 23
    %v33 = vsub.s32 %v32, 127
    %v34 = vand.u32 2147483647, %v26
    %v35 = vand.u32 %v34, 8388607
    %v36 = vor.u32 %v35, 8388608
    %v37 = vsub.s32 0, %v36
    %v38 = vadd.s32 %v33, 1
    %vm39 = vcmp.gt.s32.totalorder %v38, 0
    %v40 = vsel %vm39, %v38, 0
    %v41 = vshrl.u32 %v40, 5
    %v42 = vand.u32 %v40, 31
    %v43 = vsub.s32 32, %v42
    %v44 = vshrl.u32 683565275, %v43
    %v45 = vshll.u32 683565275, %v42
    %v46 = vshrl.u32 2475754826, %v43
    %v47 = vor.u32 %v45, %v46
    %v48 = vshll.u32 2475754826, %v42
    %v49 = vshrl.u32 2131351028, %v43
    %v50 = vor.u32 %v48, %v49
    %v51 = vshll.u32 2131351028, %v42
    %v52 = vshrl.u32 2102212464, %v43
    %v53 = vor.u32 %v51, %v52
    %v54 = vshll.u32 2102212464, %v42
    %v55 = vshrl.u32 920167782, %v43
    %v56 = vor.u32 %v54, %v55
    %v57 = vshll.u32 920167782, %v42
    %v58 = vshrl.u32 1326507024, %v43
    %v59 = vor.u32 %v57, %v58
    %vm60 = vcmp.lt.s32.totalorder %v41, 1
    %vm61 = vcmp.lt.s32.totalorder %v41, 2
    %vm62 = vcmp.lt.s32.totalorder %v41, 3
    %vm63 = vcmp.lt.s32.totalorder %v41, 4
    %v64 = vsel %vm60, %v44, %v47
    %v65 = vsel %vm63, %v53, 2102212464
    %v66 = vsel %vm62, %v50, %v65
    %v67 = vsel %vm61, %v64, %v66
    %v68 = vsel %vm60, %v47, %v50
    %v69 = vsel %vm63, %v56, 920167782
    %v70 = vsel %vm62, %v53, %v69
    %v71 = vsel %vm61, %v68, %v70
    %v72 = vsel %vm60, %v50, %v53
    %v73 = vsel %vm63, %v59, 1326507024
    %v74 = vsel %vm62, %v56, %v73
    %v75 = vsel %vm61, %v72, %v74
    %v76 = vshll.u32 %v36, 8
    %v77 = vmul.u32.u64.compose %v76, %v75
    %v78 = vextract.low.u32 %v77
    %v79 = vextract.high.u32 %v77
    %v80 = vmul.u32.u64.compose %v76, %v71
    %v81 = vextract.low.u32 %v80
    %v82 = vextract.high.u32 %v80
    %v83 = vmul.u32 %v76, %v67
    %v84 = vadd.s32 %v79, %v81
    %vm85 = vc.u32 %v79, %v81
    %v86 = vadd.s32 %v82, 1
    %v87 = vsel %vm85, %v86, %v82
    %v88 = vadd.s32 %v83, %v87
    %v89 = vadd.s32 %v88, 536870912
    %v90 = vshrl.u32 %v89, 30
    %v91 = vshll.u32 %v90, 30
    %v92 = vsub.s32 %v88, %v91
    %vm93 = vcmp.lt.s32.totalorder %v92, 0
    %v94 = vsub.s32 0, %v92
    %v95 = vsel %vm93, %v94, %v92
    %v96 = vclz %v95
    %v97 = vsub.s32 %v96, 2
    %vm98 = vcmp.gt.s32.totalorder 0, %v97
    %v99 = vsel %vm98, 0, %v97
    %v100 = vsub.s32 32, %v99
    %v101 = vshll.u32 %v92, %v99
    %v102 = vshrl.u32 %v84, %v100
    %v103 = vor.u32 %v101, %v102
    %v104 = vsub.s32 4294967266, %v99
    %v105 = vadd.s32 %v104, 127
    %v106 = vshll.u32 %v105, 23
    %v107 = vor.u32 4788187, %v106
    %v108 = vand.u32 2147483647, %v107
    %v110 = vcvt.s32.f32 %v103
    %v111 = vmul.f32 %v110, %v108
    %v112 = vxor.u32 %v111, 2147483648
    %v113 = vsel %vm30, %v112, %v111
    %v114 = vsub.s32 4, %v90
    %v115 = vsel %vm30, %v114, %v90
    %v116 = vsel %vm29, %v26, %v113
    %v117 = vsel %vm29, 0, %v115
    %v118 = vcosq.f32.pop %v116
    %v119 = vsinq.f32.pop %v116
    %vm120 = vweird.f32 %v26
    %v121 = vadd.s32 %v117, 3
    %v122 = vand.u32 %v121, 3
    %vm123 = vcmp.lt.s32.totalorder %v122, 2
    %vm124 = vcmp.eq.s32.totalorder %v122, 0
    %v125 = vxor.u32 %v119, 2147483648
    %v126 = vsel %vm124, %v118, %v125
    %vm127 = vcmp.eq.s32.totalorder %v122, 2
    %v128 = vxor.u32 %v118, 2147483648
    %v129 = vsel %vm127, %v128, %v119
    %v130 = vsel %vm123, %v126, %v129
    %v131 = vsel %vm120, nan, %v130
    %v132 = vand.u32 2147483647, %v27
    %vm133 = vcmp.le.f32.partialorder %v132, 0.7853982
    %vm134 = vcmp.lt.s32.totalorder %v27, 0
    %v135 = vand.u32 %v27, 2139095040
    %v136 = vshrl.u32 %v135, 23
    %v137 = vsub.s32 %v136, 127
    %v138 = vand.u32 2147483647, %v27
    %v139 = vand.u32 %v138, 8388607
    %v140 = vor.u32 %v139, 8388608
    %v141 = vsub.s32 0, %v140
    %v142 = vadd.s32 %v137, 1
    %vm143 = vcmp.gt.s32.totalorder %v142, 0
    %v144 = vsel %vm143, %v142, 0
    %v145 = vshrl.u32 %v144, 5
    %v146 = vand.u32 %v144, 31
    %v147 = vsub.s32 32, %v146
    %v148 = vshrl.u32 683565275, %v147
    %v149 = vshll.u32 683565275, %v146
    %v150 = vshrl.u32 2475754826, %v147
    %v151 = vor.u32 %v149, %v150
    %v152 = vshll.u32 2475754826, %v146
    %v153 = vshrl.u32 2131351028, %v147
    %v154 = vor.u32 %v152, %v153
    %v155 = vshll.u32 2131351028, %v146
    %v156 = vshrl.u32 2102212464, %v147
    %v157 = vor.u32 %v155, %v156
    %v158 = vshll.u32 2102212464, %v146
    %v159 = vshrl.u32 920167782, %v147
    %v160 = vor.u32 %v158, %v159
    %v161 = vshll.u32 920167782, %v146
    %v162 = vshrl.u32 1326507024, %v147
    %v163 = vor.u32 %v161, %v162
    %vm164 = vcmp.lt.s32.totalorder %v145, 1
    %vm165 = vcmp.lt.s32.totalorder %v145, 2
    %vm166 = vcmp.lt.s32.totalorder %v145, 3
    %vm167 = vcmp.lt.s32.totalorder %v145, 4
    %v168 = vsel %vm164, %v148, %v151
    %v169 = vsel %vm167, %v157, 2102212464
    %v170 = vsel %vm166, %v154, %v169
    %v171 = vsel %vm165, %v168, %v170
    %v172 = vsel %vm164, %v151, %v154
    %v173 = vsel %vm167, %v160, 920167782
    %v174 = vsel %vm166, %v157, %v173
    %v175 = vsel %vm165, %v172, %v174
    %v176 = vsel %vm164, %v154, %v157
    %v177 = vsel %vm167, %v163, 1326507024
    %v178 = vsel %vm166, %v160, %v177
    %v179 = vsel %vm165, %v176, %v178
    %v180 = vshll.u32 %v140, 8
    %v181 = vmul.u32.u64.compose %v180, %v179
    %v182 = vextract.low.u32 %v181
    %v183 = vextract.high.u32 %v181
    %v184 = vmul.u32.u64.compose %v180, %v175
    %v185 = vextract.low.u32 %v184
    %v186 = vextract.high.u32 %v184
    %v187 = vmul.u32 %v180, %v171
    %v188 = vadd.s32 %v183, %v185
    %vm189 = vc.u32 %v183, %v185
    %v190 = vadd.s32 %v186, 1
    %v191 = vsel %vm189, %v190, %v186
    %v192 = vadd.s32 %v187, %v191
    %v193 = vadd.s32 %v192, 536870912
    %v194 = vshrl.u32 %v193, 30
    %v195 = vshll.u32 %v194, 30
    %v196 = vsub.s32 %v192, %v195
    %vm197 = vcmp.lt.s32.totalorder %v196, 0
    %v198 = vsub.s32 0, %v196
    %v199 = vsel %vm197, %v198, %v196
    %v200 = vclz %v199
    %v201 = vsub.s32 %v200, 2
    %vm202 = vcmp.gt.s32.totalorder 0, %v201
    %v203 = vsel %vm202, 0, %v201
    %v204 = vsub.s32 32, %v203
    %v205 = vshll.u32 %v196, %v203
    %v206 = vshrl.u32 %v188, %v204
    %v207 = vor.u32 %v205, %v206
    %v208 = vsub.s32 4294967266, %v203
    %v209 = vadd.s32 %v208, 127
    %v210 = vshll.u32 %v209, 23
    %v211 = vor.u32 4788187, %v210
    %v212 = vand.u32 2147483647, %v211
    %v214 = vcvt.s32.f32 %v207
    %v215 = vmul.f32 %v214, %v212
    %v216 = vxor.u32 %v215, 2147483648
    %v217 = vsel %vm134, %v216, %v215
    %v218 = vsub.s32 4, %v194
    %v219 = vsel %vm134, %v218, %v194
    %v220 = vsel %vm133, %v27, %v217
    %v221 = vsel %vm133, 0, %v219
    %v222 = vcosq.f32.pop %v220
    %v223 = vsinq.f32.pop %v220
    %vm224 = vweird.f32 %v27
    %v225 = vadd.s32 %v221, 3
    %v226 = vand.u32 %v225, 3
    %vm227 = vcmp.lt.s32.totalorder %v226, 2
    %vm228 = vcmp.eq.s32.totalorder %v226, 0
    %v229 = vxor.u32 %v223, 2147483648
    %v230 = vsel %vm228, %v222, %v229
    %vm231 = vcmp.eq.s32.totalorder %v226, 2
    %v232 = vxor.u32 %v222, 2147483648
    %v233 = vsel %vm231, %v232, %v223
    %v234 = vsel %vm227, %v230, %v233
    %v235 = vsel %vm224, nan, %v234
    %v236 = vmul.f32 %v131, %v131
    %v237 = vmul.f32 %v235, %v235
    %238 = vset.pattern.permute.xlu0 1
    %239 = vperm.xlu0 %238, %v14
    %v240 = vpop.permute.xlu0 %239
    %242 = vset.pattern.permute.xlu0 1
    %243 = vperm.xlu0 %242, %v15
    %v244 = vpop.permute.xlu0 %243
    %v246 = vmul.f32 %v240, %v236
    %v247 = vmul.f32 %v244, %v237
    %v248 = vadd.f32 %v12, %v246
    %v249 = vadd.f32 %v13, %v247
    %250 = vst [vmem:[#allocation2] sm:$0xff] %v248
    %251 = vst [vmem:[#allocation2 + $0x8] sm:$0xff] %v249
    // Predicated region
    $region10: #{tpu_custom_call.1} parent=1 // pred_check
      _
    $region11: #{tpu_custom_call.1} parent=1 // pred_check_branch
      %253 = sbr.rel (0) target = $region13
    $region12: #{tpu_custom_call.1} parent=1 // pred_region
      %s255 = ssub.s32 256, 256
      %256 = vsyncadd [#allocation3], %s255
      %s257 = sshll.u32 [#allocation2], 4
      %s258 = int_to_ptr.vmem [resolvable:$true] %s257
      %263 = dma.vmem_to_hbm [thread:$0]  %s258, 256, %s2, [#allocation3], 128, 128, 8
    $region13: #{tpu_custom_call.1} parent=1 // pred_fallthru
      _
    // Predicated region
    $region14: #{tpu_custom_call.1} parent=1 // pred_check
      _
    $region15: #{tpu_custom_call.1} parent=1 // pred_check_branch
      %265 = sbr.rel (0) target = $region17
    $region16: #{tpu_custom_call.1} parent=1 // pred_region
      %266 = dma.done [#allocation3], 256
    $region17: #{tpu_custom_call.1} parent=1 // pred_fallthru
      _
    %267 = vsyncpa [#allocation3], 1

</llo_original>
